<compile_context>
chip_gen: v6e
topology: v6e:2x2x1
jax: 0.10.0
libtpu: 0.0.40
codegen_flags: <defaults>
</compile_context>

<pallas_src>
import functools

import jax
import jax.numpy as jnp
from jax.experimental import pallas as pl
from jax.experimental.pallas import tpu as pltpu

_LEAKY_SLOPE = 0.01   # F.leaky_relu default negative_slope
_LANE = 128
_SUBLANE = 8
_MAX_BM = 256         # largest batch tile: (256,128) f32 working set -> no vreg spills


def _round_up(x, m):
    return ((x + m - 1) // m) * m


def _tensorcores_per_chip():
    """2 TensorCores on v7x, 1 on v5e/v6e. Defaults to 1 if unknown."""
    try:
        kind = jax.devices()[0].device_kind
    except Exception:
        return 1
    return 2 if "7" in str(kind) else 1


def _vmem_capacity_bytes():
    try:
        return int(pltpu.get_tpu_info().vmem_capacity_bytes)
    except Exception:
        return 64 * 1024 * 1024  # conservative: v7x per-TC VMEM


def _vmem_limit_bytes(group_bytes, x_blk_bytes, o_blk_bytes, vmem_cap):
    # 2x on everything for default double buffering + margin for internal scratch.
    est = 2 * group_bytes + 2 * x_blk_bytes + 2 * o_blk_bytes + (8 << 20)
    limit = max(est, 32 << 20)            # never below the common default
    return int(min(limit, vmem_cap - (2 << 20)))


# ----------------------------------------------------------------------------
# Kernel: a run of consecutive layers for one batch tile.
# refs = (x, w1, b1, w2, b2, ..., out)
# ----------------------------------------------------------------------------
def _make_fused_mlp_kernel(n_layers, apply_final_act):
    def kernel(*refs):
        x_ref = refs[0]
        o_ref = refs[-1]
        h = x_ref[...]                                   # bf16, straight into the MXU
        for i in range(n_layers):
            w_ref = refs[1 + 2 * i]                      # (Dip, Dop)  bf16
            b_ref = refs[2 + 2 * i]                      # (1,   Dop)  f32
            h = jnp.dot(h.astype(w_ref.dtype), w_ref[...],
                        preferred_element_type=jnp.float32)
            h = h + b_ref[...]                           # bias + act stay f32 (v5e VPU)
            if i < n_layers - 1 or apply_final_act:
                h = jnp.where(h > 0, h, _LEAKY_SLOPE * h)
        o_ref[...] = h.astype(o_ref.dtype)
    return kernel


# ----------------------------------------------------------------------------
# Parameter init (mirrors nn.Linear default uniform +/- 1/sqrt(fan_in))
# ----------------------------------------------------------------------------
def init_params(key, shape):
    """Unpadded f32 master params. PyTorch weight is (out, in); we store the
    transpose (in, out) so the kernel computes x @ W_t + b directly."""
    params = []
    for ins, outs in zip(shape[:-1], shape[1:]):
        ins_, outs_ = abs(int(ins)), abs(int(outs))
        key, kw, kb = jax.random.split(key, 3)
        bound = 1.0 / float(ins_) ** 0.5
        w_t = jax.random.uniform(kw, (ins_, outs_), jnp.float32, -bound, bound)
        b = jax.random.uniform(kb, (outs_,), jnp.float32, -bound, bound)
        params.append((w_t, b))
    return params


def pad_params(params, weight_dtype=jnp.bfloat16):
    """Zero-pad feature dims to 128-lane multiples (exact: leaky_relu(0)==0) and cast
    weights. The FIRST layer keeps its true in-dim so x needs no feature padding."""
    padded = []
    for li, (w_t, b) in enumerate(params):
        ins, outs = w_t.shape
        ins_p = ins if li == 0 else _round_up(ins, _LANE)
        outs_p = _round_up(outs, _LANE)
        w_p = jnp.zeros((ins_p, outs_p), weight_dtype)
        w_p = w_p.at[:ins, :outs].set(w_t.astype(weight_dtype))
        b_p = jnp.zeros((1, outs_p), jnp.float32).at[0, :outs].set(b)
        padded.append((w_p, b_p))
    return padded


def _split_groups(padded_params, weight_budget_bytes):
    """Greedily group consecutive layers so resident weights fit the VMEM budget."""
    groups, cur, cur_bytes = [], [], 0
    for w_p, b_p in padded_params:
        nbytes = w_p.size * w_p.dtype.itemsize + b_p.size * b_p.dtype.itemsize
        if cur and cur_bytes + nbytes > weight_budget_bytes:
            groups.append(cur)
            cur, cur_bytes = [], 0
        cur.append((w_p, b_p))
        cur_bytes += nbytes
    groups.append(cur)
    return groups
    # TODO(synk): a single layer larger than the budget would still need K/N tiling
    # (pltpu.emit_pipeline over the weight); not needed at these sizes.


# ----------------------------------------------------------------------------
# Forward wrapper.
# ----------------------------------------------------------------------------
def model_forward(padded_params, x, out_dim):
    B = x.shape[0]
    n_tc = _tensorcores_per_chip()
    vmem_cap = _vmem_capacity_bytes()

    # Batch tiling: as few tiles as possible (<=256 rows each), but keep >= n_tc tiles
    # so v7x's two TensorCores both get work on the "parallel" axis.
    target_tiles = max(n_tc, pl.cdiv(B, _MAX_BM))
    bm = max(_SUBLANE, _round_up(pl.cdiv(B, target_tiles), _SUBLANE))
    b_pad = _round_up(B, bm)
    grid = (b_pad // bm,)

    # bf16 activations into the MXU; pad only the batch dim, only when needed.
    h = x.astype(jnp.bfloat16)
    if b_pad != B:
        h = jnp.pad(h, ((0, b_pad - B), (0, 0)))

    groups = _split_groups(padded_params, int(0.25 * vmem_cap))
    n_groups = len(groups)

    for gi, group in enumerate(groups):
        is_last_group = gi == n_groups - 1
        d_in_g = h.shape[1]
        d_out_g = group[-1][0].shape[1]
        out_dtype = jnp.float32 if is_last_group else jnp.bfloat16

        flat_params = []
        in_specs = [pl.BlockSpec((bm, d_in_g), lambda i: (i, 0))]
        group_bytes = 0
        flops = 0
        for w_p, b_p in group:
            flat_params += [w_p, b_p]
            in_specs.append(pl.BlockSpec(w_p.shape, lambda i: (0, 0)))  # resident
            in_specs.append(pl.BlockSpec(b_p.shape, lambda i: (0, 0)))  # resident
            group_bytes += w_p.size * w_p.dtype.itemsize + b_p.size * b_p.dtype.itemsize
            flops += 2 * b_pad * w_p.shape[0] * w_p.shape[1]

        x_bytes = b_pad * d_in_g * h.dtype.itemsize
        o_bytes = b_pad * d_out_g * jnp.dtype(out_dtype).itemsize
        cost = pl.CostEstimate(flops=flops, transcendentals=0,
                               bytes_accessed=x_bytes + group_bytes + o_bytes)
        vmem_limit = _vmem_limit_bytes(group_bytes,
                                       bm * d_in_g * h.dtype.itemsize,
                                       bm * d_out_g * jnp.dtype(out_dtype).itemsize,
                                       vmem_cap)

        h = pl.pallas_call(
            _make_fused_mlp_kernel(len(group), apply_final_act=not is_last_group),
            out_shape=jax.ShapeDtypeStruct((b_pad, d_out_g), out_dtype),
            grid_spec=pl.GridSpec(
                grid=grid,
                in_specs=in_specs,
                out_specs=pl.BlockSpec((bm, d_out_g), lambda i: (i, 0)),
            ),
            compiler_params=pltpu.CompilerParams(
                dimension_semantics=("parallel",),
                vmem_limit_bytes=vmem_limit),
            cost_estimate=cost,
        )(h, *flat_params)

    return h[:B, :out_dim]


# TODO(synk): step()/open_lesson()/close_lesson() (Adam update, EWC/SI importance
# accumulators) are training-time bookkeeping, not part of the forward pass; not ported.


if __name__ == "__main__":
    key = jax.random.PRNGKey(0)
    kp, kx = jax.random.split(key)

    # MLP shape consistent with the module: [in, hidden, hidden, n_classes]
    shape = [32, 64, 64, 10]
    batch = 256  # one 256-row tile on 1-TC chips, two 128-row tiles on v7x

    params = init_params(kp, shape)           # f32 master copy (PyTorch-equivalent init)
    padded = pad_params(params)               # bf16 weights, 128-lane padded outs
    x = jax.random.normal(kx, (batch, shape[0]), jnp.float32)

    fwd = jax.jit(functools.partial(model_forward, out_dim=shape[-1]))
    z = fwd(padded, x)
    jax.block_until_ready(z)
    assert z.shape == (batch, shape[-1])

    # Reference 1: plain JAX with the same bf16-operand / f32-accumulate recipe.
    ref = x
    for i, (w_t, b) in enumerate(params):
        ref = jnp.dot(ref.astype(jnp.bfloat16), w_t.astype(jnp.bfloat16),
                      preferred_element_type=jnp.float32) + b
        if i < len(params) - 1:
            ref = jnp.where(ref > 0, ref, _LEAKY_SLOPE * ref)
    assert jnp.allclose(z, ref, atol=2e-3, rtol=2e-3), "mismatch vs bf16-path reference"

    # Reference 2: full-f32 reference (original PyTorch semantics), loose tolerance
    # to bound the bf16 weight-quantization error.
    ref32 = x
    for i, (w_t, b) in enumerate(params):
        ref32 = ref32 @ w_t + b
        if i < len(params) - 1:
            ref32 = jnp.where(ref32 > 0, ref32, _LEAKY_SLOPE * ref32)
    assert jnp.allclose(z, ref32, atol=5e-2, rtol=5e-2), "mismatch vs f32 reference"

    print("KERNEL_OK")
</pallas_src>

<mosaic_0001>
module attributes {stable_mosaic.version = 11 : i64} {
  func.func @kernel(%arg0: i32, %arg1: memref<256x32xbf16, #tpu.memory_space<vmem>>, %arg2: memref<32x128xbf16, #tpu.memory_space<vmem>>, %arg3: memref<1x128xf32, #tpu.memory_space<vmem>>, %arg4: memref<128x128xbf16, #tpu.memory_space<vmem>>, %arg5: memref<1x128xf32, #tpu.memory_space<vmem>>, %arg6: memref<128x128xbf16, #tpu.memory_space<vmem>>, %arg7: memref<1x128xf32, #tpu.memory_space<vmem>>, %arg8: memref<256x128xf32, #tpu.memory_space<vmem>>) attributes {dimension_semantics = [#tpu.dimension_semantics<parallel>], iteration_bounds = array<i64: 1>, scalar_prefetch = 0 : i64, scratch_operands = 0 : i64, tpu.core_type = #tpu.core_type<tc>, window_params = [{transform_indices = @transform_0, window_bounds = array<i64: 256, 32>}, {pipeline_mode = #tpu.pipeline_mode<synchronous>, transform_indices = @transform_1, window_bounds = array<i64: 32, 128>}, {pipeline_mode = #tpu.pipeline_mode<synchronous>, transform_indices = @transform_2, window_bounds = array<i64: 1, 128>}, {pipeline_mode = #tpu.pipeline_mode<synchronous>, transform_indices = @transform_3, window_bounds = array<i64: 128, 128>}, {pipeline_mode = #tpu.pipeline_mode<synchronous>, transform_indices = @transform_4, window_bounds = array<i64: 1, 128>}, {pipeline_mode = #tpu.pipeline_mode<synchronous>, transform_indices = @transform_5, window_bounds = array<i64: 128, 128>}, {pipeline_mode = #tpu.pipeline_mode<synchronous>, transform_indices = @transform_6, window_bounds = array<i64: 1, 128>}, {transform_indices = @transform_7, window_bounds = array<i64: 256, 128>}]} {
    %c0 = arith.constant 0 : index
    %c0_0 = arith.constant 0 : index
    %0 = vector.load %arg1[%c0, %c0_0] : memref<256x32xbf16, #tpu.memory_space<vmem>>, vector<256x32xbf16>
    %c0_1 = arith.constant 0 : index
    %c0_2 = arith.constant 0 : index
    %1 = vector.load %arg2[%c0_1, %c0_2] : memref<32x128xbf16, #tpu.memory_space<vmem>>, vector<32x128xbf16>
    %cst = arith.constant dense<0.000000e+00> : vector<256x128xf32>
    %2 = tpu.matmul %0, %1, %cst {dimension_numbers = #tpu.dot_dimension_numbers<[1], [0], [0], [1], [0, 0, 1, 1], [], []>} : vector<256x32xbf16>, vector<32x128xbf16>, vector<256x128xf32> -> vector<256x128xf32>
    %c0_3 = arith.constant 0 : index
    %c0_4 = arith.constant 0 : index
    %3 = vector.load %arg3[%c0_3, %c0_4] : memref<1x128xf32, #tpu.memory_space<vmem>>, vector<1x128xf32>
    %4 = vector.broadcast %3 : vector<1x128xf32> to vector<256x128xf32>
    %5 = arith.addf %2, %4 : vector<256x128xf32>
    %cst_5 = arith.constant 0.000000e+00 : f32
    %6 = vector.broadcast %cst_5 : f32 to vector<256x128xf32>
    %7 = arith.cmpf ogt, %5, %6 : vector<256x128xf32>
    %cst_6 = arith.constant 0.00999999977 : f32
    %8 = vector.broadcast %cst_6 : f32 to vector<256x128xf32>
    %9 = arith.mulf %8, %5 : vector<256x128xf32>
    %10 = arith.select %7, %5, %9 : vector<256x128xi1>, vector<256x128xf32>
    %11 = arith.truncf %10 : vector<256x128xf32> to vector<256x128xbf16>
    %c0_7 = arith.constant 0 : index
    %c0_8 = arith.constant 0 : index
    %12 = vector.load %arg4[%c0_7, %c0_8] : memref<128x128xbf16, #tpu.memory_space<vmem>>, vector<128x128xbf16>
    %cst_9 = arith.constant dense<0.000000e+00> : vector<256x128xf32>
    %13 = tpu.matmul %11, %12, %cst_9 {dimension_numbers = #tpu.dot_dimension_numbers<[1], [0], [0], [1], [0, 0, 1, 1], [], []>} : vector<256x128xbf16>, vector<128x128xbf16>, vector<256x128xf32> -> vector<256x128xf32>
    %c0_10 = arith.constant 0 : index
    %c0_11 = arith.constant 0 : index
    %14 = vector.load %arg5[%c0_10, %c0_11] : memref<1x128xf32, #tpu.memory_space<vmem>>, vector<1x128xf32>
    %15 = vector.broadcast %14 : vector<1x128xf32> to vector<256x128xf32>
    %16 = arith.addf %13, %15 : vector<256x128xf32>
    %cst_12 = arith.constant 0.000000e+00 : f32
    %17 = vector.broadcast %cst_12 : f32 to vector<256x128xf32>
    %18 = arith.cmpf ogt, %16, %17 : vector<256x128xf32>
    %cst_13 = arith.constant 0.00999999977 : f32
    %19 = vector.broadcast %cst_13 : f32 to vector<256x128xf32>
    %20 = arith.mulf %19, %16 : vector<256x128xf32>
    %21 = arith.select %18, %16, %20 : vector<256x128xi1>, vector<256x128xf32>
    %22 = arith.truncf %21 : vector<256x128xf32> to vector<256x128xbf16>
    %c0_14 = arith.constant 0 : index
    %c0_15 = arith.constant 0 : index
    %23 = vector.load %arg6[%c0_14, %c0_15] : memref<128x128xbf16, #tpu.memory_space<vmem>>, vector<128x128xbf16>
    %cst_16 = arith.constant dense<0.000000e+00> : vector<256x128xf32>
    %24 = tpu.matmul %22, %23, %cst_16 {dimension_numbers = #tpu.dot_dimension_numbers<[1], [0], [0], [1], [0, 0, 1, 1], [], []>} : vector<256x128xbf16>, vector<128x128xbf16>, vector<256x128xf32> -> vector<256x128xf32>
    %c0_17 = arith.constant 0 : index
    %c0_18 = arith.constant 0 : index
    %25 = vector.load %arg7[%c0_17, %c0_18] : memref<1x128xf32, #tpu.memory_space<vmem>>, vector<1x128xf32>
    %26 = vector.broadcast %25 : vector<1x128xf32> to vector<256x128xf32>
    %27 = arith.addf %24, %26 : vector<256x128xf32>
    %c0_19 = arith.constant 0 : index
    %c0_20 = arith.constant 0 : index
    %28 = vector.load %arg8[%c0_19, %c0_20] : memref<256x128xf32, #tpu.memory_space<vmem>>, vector<256x128xf32>
    tpu.vector_store %arg8[%c0_19, %c0_20], %27 {strides = array<i32>} : memref<256x128xf32, #tpu.memory_space<vmem>>, vector<256x128xf32>,
    return
  }
  func.func @transform_0(%arg0: i32) -> (i32, i32) {
    %c0_i32 = arith.constant 0 : i32
    %c0_i32_0 = arith.constant 0 : i32
    return %arg0, %c0_i32 : i32, i32
  }
  func.func @transform_1(%arg0: i32) -> (i32, i32) {
    %c0_i32 = arith.constant 0 : i32
    %c0_i32_0 = arith.constant 0 : i32
    %c0_i32_1 = arith.constant 0 : i32
    return %c0_i32, %c0_i32_0 : i32, i32
  }
  func.func @transform_2(%arg0: i32) -> (i32, i32) {
    %c0_i32 = arith.constant 0 : i32
    %c0_i32_0 = arith.constant 0 : i32
    %c0_i32_1 = arith.constant 0 : i32
    return %c0_i32, %c0_i32_0 : i32, i32
  }
  func.func @transform_3(%arg0: i32) -> (i32, i32) {
    %c0_i32 = arith.constant 0 : i32
    %c0_i32_0 = arith.constant 0 : i32
    %c0_i32_1 = arith.constant 0 : i32
    return %c0_i32, %c0_i32_0 : i32, i32
  }
  func.func @transform_4(%arg0: i32) -> (i32, i32) {
    %c0_i32 = arith.constant 0 : i32
    %c0_i32_0 = arith.constant 0 : i32
    %c0_i32_1 = arith.constant 0 : i32
    return %c0_i32, %c0_i32_0 : i32, i32
  }
  func.func @transform_5(%arg0: i32) -> (i32, i32) {
    %c0_i32 = arith.constant 0 : i32
    %c0_i32_0 = arith.constant 0 : i32
    %c0_i32_1 = arith.constant 0 : i32
    return %c0_i32, %c0_i32_0 : i32, i32
  }
  func.func @transform_6(%arg0: i32) -> (i32, i32) {
    %c0_i32 = arith.constant 0 : i32
    %c0_i32_0 = arith.constant 0 : i32
    %c0_i32_1 = arith.constant 0 : i32
    return %c0_i32, %c0_i32_0 : i32, i32
  }
  func.func @transform_7(%arg0: i32) -> (i32, i32) {
    %c0_i32 = arith.constant 0 : i32
    %c0_i32_0 = arith.constant 0 : i32
    return %arg0, %c0_i32 : i32, i32
  }
}

</mosaic_0001>

<llo_original>
// kernel: model_forward.1
$region0: #{model_forward.1}
  #allocation0 [shape = 'u32[]', space=smem, size = 0x4, offset = 0x4, fixed_abs, tag = 'smem constant byte address 0x4 - core index']
  #allocation1 [shape = 'u32[144,128]{1,0:T(1,128)}', space=vmem, size = 0x12000, scoped, tag = 'internal scratch']
  %s0 = inlined_call_operand.vmem [shape: bf16[256,32], index: 0, kind: input, shape index: {}]
  %s1 = inlined_call_operand.vmem [shape: bf16[32,128], index: 1, kind: input, shape index: {}]
  %s2 = inlined_call_operand.vmem [shape: f32[1,128], index: 2, kind: input, shape index: {}]
  %s3 = inlined_call_operand.vmem [shape: bf16[128,128], index: 3, kind: input, shape index: {}]
  %s4 = inlined_call_operand.vmem [shape: f32[1,128], index: 4, kind: input, shape index: {}]
  %s5 = inlined_call_operand.vmem [shape: bf16[128,128], index: 5, kind: input, shape index: {}]
  %s6 = inlined_call_operand.vmem [shape: f32[1,128], index: 6, kind: input, shape index: {}]
  %s7 = inlined_call_operand.vmem [shape: f32[256,128], index: 7, kind: output, shape index: {}]
  %s8 = sld [smem:[#allocation0]]
  $region38: #{model_forward.1} parent=0
    _
  %s10 = ssub.s32 1, %s8
  %s11 = scalar_select 0, %s10, %s8
  // Predicated region
  $region2: #{model_forward.1} parent=0 // pred_check
    _
  $region3: #{model_forward.1} parent=0 // pred_check_branch
    %13 = sbr.rel (0) target = $region5
  $region4: #{model_forward.1} parent=0 // pred_region
    _
  $region5: #{model_forward.1} parent=0 // pred_fallthru
    _
  // Predicated region
  $region6: #{model_forward.1} parent=0 // pred_check
    _
  $region7: #{model_forward.1} parent=0 // pred_check_branch
    %15 = sbr.rel (0) target = $region9
  $region8: #{model_forward.1} parent=0 // pred_region
    _
  $region9: #{model_forward.1} parent=0 // pred_fallthru
    _
  // Predicated region
  $region10: #{model_forward.1} parent=0 // pred_check
    _
  $region11: #{model_forward.1} parent=0 // pred_check_branch
    %17 = sbr.rel (0) target = $region13
  $region12: #{model_forward.1} parent=0 // pred_region
    _
  $region13: #{model_forward.1} parent=0 // pred_fallthru
    _
  // Predicated region
  $region14: #{model_forward.1} parent=0 // pred_check
    _
  $region15: #{model_forward.1} parent=0 // pred_check_branch
    %19 = sbr.rel (0) target = $region17
  $region16: #{model_forward.1} parent=0 // pred_region
    _
  $region17: #{model_forward.1} parent=0 // pred_fallthru
    _
  // Predicated region
  $region18: #{model_forward.1} parent=0 // pred_check
    _
  $region19: #{model_forward.1} parent=0 // pred_check_branch
    %21 = sbr.rel (0) target = $region21
  $region20: #{model_forward.1} parent=0 // pred_region
    _
  $region21: #{model_forward.1} parent=0 // pred_fallthru
    _
  // Predicated region
  $region22: #{model_forward.1} parent=0 // pred_check
    _
  $region23: #{model_forward.1} parent=0 // pred_check_branch
    %23 = sbr.rel (0) target = $region25
  $region24: #{model_forward.1} parent=0 // pred_region
    _
  $region25: #{model_forward.1} parent=0 // pred_fallthru
    _
  // Predicated region
  $region26: #{model_forward.1} parent=0 // pred_check
    _
  $region27: #{model_forward.1} parent=0 // pred_check_branch
    %25 = sbr.rel (0) target = $region29
  $region28: #{model_forward.1} parent=0 // pred_region
    _
  $region29: #{model_forward.1} parent=0 // pred_fallthru
    _
  %v27 = vld [vmem:[%s0] sm:$0xf]
  %v28 = vld [vmem:[%s0 + $0x4] sm:$0xf]
  %v29 = vld [vmem:[%s0 + $0x8] sm:$0xf]
  %v30 = vld [vmem:[%s0 + $0xc] sm:$0xf]
  %v31 = vld [vmem:[%s0 + $0x10] sm:$0xf]
  %v32 = vld [vmem:[%s0 + $0x14] sm:$0xf]
  %v33 = vld [vmem:[%s0 + $0x18] sm:$0xf]
  %v34 = vld [vmem:[%s0 + $0x1c] sm:$0xf]
  %v35 = vld [vmem:[%s0 + $0x20] sm:$0xf]
  %v36 = vld [vmem:[%s0 + $0x24] sm:$0xf]
  %v37 = vld [vmem:[%s0 + $0x28] sm:$0xf]
  %v38 = vld [vmem:[%s0 + $0x2c] sm:$0xf]
  %v39 = vld [vmem:[%s0 + $0x30] sm:$0xf]
  %v40 = vld [vmem:[%s0 + $0x34] sm:$0xf]
  %v41 = vld [vmem:[%s0 + $0x38] sm:$0xf]
  %v42 = vld [vmem:[%s0 + $0x3c] sm:$0xf]
  %v43 = vld [vmem:[%s0 + $0x40] sm:$0xf]
  %v44 = vld [vmem:[%s0 + $0x44] sm:$0xf]
  %v45 = vld [vmem:[%s0 + $0x48] sm:$0xf]
  %v46 = vld [vmem:[%s0 + $0x4c] sm:$0xf]
  %v47 = vld [vmem:[%s0 + $0x50] sm:$0xf]
  %v48 = vld [vmem:[%s0 + $0x54] sm:$0xf]
  %v49 = vld [vmem:[%s0 + $0x58] sm:$0xf]
  %v50 = vld [vmem:[%s0 + $0x5c] sm:$0xf]
  %v51 = vld [vmem:[%s0 + $0x60] sm:$0xf]
  %v52 = vld [vmem:[%s0 + $0x64] sm:$0xf]
  %v53 = vld [vmem:[%s0 + $0x68] sm:$0xf]
  %v54 = vld [vmem:[%s0 + $0x6c] sm:$0xf]
  %v55 = vld [vmem:[%s0 + $0x70] sm:$0xf]
  %v56 = vld [vmem:[%s0 + $0x74] sm:$0xf]
  %v57 = vld [vmem:[%s0 + $0x78] sm:$0xf]
  %v58 = vld [vmem:[%s0 + $0x7c] sm:$0xf]
  %v59 = vld [vmem:[%s1] sm:$0xf]
  %v60 = vld [vmem:[%s1 + $0x4] sm:$0xf]
  %v61 = vld [vmem:[%s1 + $0x8] sm:$0xf]
  %v62 = vld [vmem:[%s1 + $0xc] sm:$0xf]
  %v63 = vld [vmem:[%s2] sm:$0x1]
  %v65 = vlaneseq
  %v66 = vshrl.u32 %v65, 7
  %v67 = vsub.s32 0, %v66
  %v68 = vrot.slane %v63, %v67
  %v102 = vunpack.c.l.b16 %v27
  %v103 = vunpack.c.l.b16 %v28
  %v104 = vunpack.c.l.b16 %v29
  %v105 = vunpack.c.l.b16 %v30
  %v106 = vunpack.c.l.b16 %v31
  %v107 = vunpack.c.l.b16 %v32
  %v108 = vunpack.c.l.b16 %v33
  %v109 = vunpack.c.l.b16 %v34
  %v110 = vunpack.c.l.b16 %v35
  %v111 = vunpack.c.l.b16 %v36
  %v112 = vunpack.c.l.b16 %v37
  %v113 = vunpack.c.l.b16 %v38
  %v114 = vunpack.c.l.b16 %v39
  %v115 = vunpack.c.l.b16 %v40
  %v116 = vunpack.c.l.b16 %v41
  %v117 = vunpack.c.l.b16 %v42
  %v118 = vunpack.c.l.b16 %v43
  %v119 = vunpack.c.l.b16 %v44
  %v120 = vunpack.c.l.b16 %v45
  %v121 = vunpack.c.l.b16 %v46
  %v122 = vunpack.c.l.b16 %v47
  %v123 = vunpack.c.l.b16 %v48
  %v124 = vunpack.c.l.b16 %v49
  %v125 = vunpack.c.l.b16 %v50
  %v126 = vunpack.c.l.b16 %v51
  %v127 = vunpack.c.l.b16 %v52
  %v128 = vunpack.c.l.b16 %v53
  %v129 = vunpack.c.l.b16 %v54
  %v130 = vunpack.c.l.b16 %v55
  %v131 = vunpack.c.l.b16 %v56
  %v132 = vunpack.c.l.b16 %v57
  %v133 = vunpack.c.l.b16 %v58
  %v134 = vpack.c.b16 %v103, %v102
  %v135 = vpack.c.b16 %v105, %v104
  %v136 = vpack.c.b16 %v107, %v106
  %v137 = vpack.c.b16 %v109, %v108
  %v138 = vpack.c.b16 %v111, %v110
  %v139 = vpack.c.b16 %v113, %v112
  %v140 = vpack.c.b16 %v115, %v114
  %v141 = vpack.c.b16 %v117, %v116
  %v142 = vpack.c.b16 %v119, %v118
  %v143 = vpack.c.b16 %v121, %v120
  %v144 = vpack.c.b16 %v123, %v122
  %v145 = vpack.c.b16 %v125, %v124
  %v146 = vpack.c.b16 %v127, %v126
  %v147 = vpack.c.b16 %v129, %v128
  %v148 = vpack.c.b16 %v131, %v130
  %v149 = vpack.c.b16 %v133, %v132
  %v154 = vunpack.c.l.b16 %v59
  %v155 = vunpack.c.l.b16 %v60
  %v156 = vunpack.c.l.b16 %v61
  %v157 = vunpack.c.l.b16 %v62
  %v158 = vpack.c.b16 %v155, %v154
  %v159 = vpack.c.b16 %v157, %v156
  %vm162 = vcmask 261120
  %v164 = vsel %vm162, %v134, 0
  %v167 = vsel %vm162, %v135, 0
  %v170 = vsel %vm162, %v136, 0
  %v173 = vsel %vm162, %v137, 0
  %v176 = vsel %vm162, %v138, 0
  %v179 = vsel %vm162, %v139, 0
  %v182 = vsel %vm162, %v140, 0
  %v185 = vsel %vm162, %v141, 0
  %v188 = vsel %vm162, %v142, 0
  %v191 = vsel %vm162, %v143, 0
  %v194 = vsel %vm162, %v144, 0
  %v197 = vsel %vm162, %v145, 0
  %v200 = vsel %vm162, %v146, 0
  %v203 = vsel %vm162, %v147, 0
  %v206 = vsel %vm162, %v148, 0
  %v209 = vsel %vm162, %v149, 0
  %211 = vmatprep.subr.bf16.mxu0 0
  %212 = vmatpush1.bf16.msra.mxu0 0
  %213 = vmatprep.subr.bf16.mxu0 0
  %214 = vmatpush1.bf16.msra.mxu0 0
  %215 = vmatprep.subr.bf16.mxu0 0
  %216 = vmatpush1.bf16.msra.mxu0 0
  %217 = vmatprep.subr.bf16.mxu0 0
  %218 = vmatpush1.bf16.msra.mxu0 0
  %219 = vmatprep.subr.bf16.mxu0 0
  %220 = vmatpush1.bf16.msra.mxu0 0
  %221 = vmatprep.subr.bf16.mxu0 0
  %222 = vmatpush1.bf16.msra.mxu0 0
  %223 = vmatprep.subr.bf16.mxu0 0
  %224 = vmatpush1.bf16.msra.mxu0 %v159
  %225 = vmatprep.subr.bf16.mxu0 0
  %226 = vmatpush1.bf16.msra.mxu0 %v158
  %227 = vmatprep.subr.bf16.mxu0 0
  %228 = vmatpush2.bf16.msra.mxu0 0
  %229 = vmatprep.subr.bf16.mxu0 0
  %230 = vmatpush2.bf16.msra.mxu0 0
  %231 = vmatprep.subr.bf16.mxu0 0
  %232 = vmatpush2.bf16.msra.mxu0 0
  %233 = vmatprep.subr.bf16.mxu0 0
  %234 = vmatpush2.bf16.msra.mxu0 0
  %235 = vmatprep.subr.bf16.mxu0 0
  %236 = vmatpush2.bf16.msra.mxu0 0
  %237 = vmatprep.subr.bf16.mxu0 0
  %238 = vmatpush2.bf16.msra.mxu0 0
  %239 = vmatprep.subr.bf16.mxu0 0
  %240 = vmatpush2.bf16.msra.mxu0 0
  %241 = vmatprep.subr.bf16.mxu0 0
  %242 = vmatpush2.bf16.msra.mxu0 0
  %243 = vmatprep.mubr.bf16.mxu0 0
  %244 = vmatmul.mubr.bf16.gmra.mxu0 %v164
  %v245 = vpop.f32.mrf.mxu0
  %v246 = vadd.f32 %v68, %v245
  %v247 = vpop.f32.mrf.mxu0
  %v248 = vpop.f32.mrf.mxu0
  %v249 = vadd.f32 %v68, %v248
  %v250 = vpop.f32.mrf.mxu0
  %251 = vmatprep.mubr.bf16.mxu0 0
  %252 = vmatmul.mubr.bf16.gmra.mxu0 %v167
  %v253 = vpop.f32.mrf.mxu0
  %v254 = vadd.f32 %v68, %v253
  %v255 = vpop.f32.mrf.mxu0
  %v256 = vpop.f32.mrf.mxu0
  %v257 = vadd.f32 %v68, %v256
  %v258 = vpop.f32.mrf.mxu0
  %259 = vmatprep.mubr.bf16.mxu0 0
  %260 = vmatmul.mubr.bf16.gmra.mxu0 %v170
  %v261 = vpop.f32.mrf.mxu0
  %v262 = vadd.f32 %v68, %v261
  %v263 = vpop.f32.mrf.mxu0
  %v264 = vpop.f32.mrf.mxu0
  %v265 = vadd.f32 %v68, %v264
  %v266 = vpop.f32.mrf.mxu0
  %267 = vmatprep.mubr.bf16.mxu0 0
  %268 = vmatmul.mubr.bf16.gmra.mxu0 %v173
  %v269 = vpop.f32.mrf.mxu0
  %v270 = vadd.f32 %v68, %v269
  %v271 = vpop.f32.mrf.mxu0
  %v272 = vpop.f32.mrf.mxu0
  %v273 = vadd.f32 %v68, %v272
  %v274 = vpop.f32.mrf.mxu0
  %275 = vmatprep.mubr.bf16.mxu0 0
  %276 = vmatmul.mubr.bf16.gmra.mxu0 %v176
  %v277 = vpop.f32.mrf.mxu0
  %v278 = vadd.f32 %v68, %v277
  %v279 = vpop.f32.mrf.mxu0
  %v280 = vpop.f32.mrf.mxu0
  %v281 = vadd.f32 %v68, %v280
  %v282 = vpop.f32.mrf.mxu0
  %283 = vmatprep.mubr.bf16.mxu0 0
  %284 = vmatmul.mubr.bf16.gmra.mxu0 %v179
  %v285 = vpop.f32.mrf.mxu0
  %v286 = vadd.f32 %v68, %v285
  %v287 = vpop.f32.mrf.mxu0
  %v288 = vpop.f32.mrf.mxu0
  %v289 = vadd.f32 %v68, %v288
  %v290 = vpop.f32.mrf.mxu0
  %291 = vmatprep.mubr.bf16.mxu0 0
  %292 = vmatmul.mubr.bf16.gmra.mxu0 %v182
  %v293 = vpop.f32.mrf.mxu0
  %v294 = vadd.f32 %v68, %v293
  %v295 = vpop.f32.mrf.mxu0
  %v296 = vpop.f32.mrf.mxu0
  %v297 = vadd.f32 %v68, %v296
  %v298 = vpop.f32.mrf.mxu0
  %299 = vmatprep.mubr.bf16.mxu0 0
  %300 = vmatmul.mubr.bf16.gmra.mxu0 %v185
  %v301 = vpop.f32.mrf.mxu0
  %v302 = vadd.f32 %v68, %v301
  %v303 = vpop.f32.mrf.mxu0
  %v304 = vpop.f32.mrf.mxu0
  %v305 = vadd.f32 %v68, %v304
  %v306 = vpop.f32.mrf.mxu0
  %307 = vmatprep.mubr.bf16.mxu0 0
  %308 = vmatmul.mubr.bf16.gmra.mxu0 %v188
  %v309 = vpop.f32.mrf.mxu0
  %v310 = vadd.f32 %v68, %v309
  %v311 = vpop.f32.mrf.mxu0
  %v312 = vpop.f32.mrf.mxu0
  %v313 = vadd.f32 %v68, %v312
  %v314 = vpop.f32.mrf.mxu0
  %315 = vmatprep.mubr.bf16.mxu0 0
  %316 = vmatmul.mubr.bf16.gmra.mxu0 %v191
  %v317 = vpop.f32.mrf.mxu0
  %v318 = vadd.f32 %v68, %v317
  %v319 = vpop.f32.mrf.mxu0
  %v320 = vpop.f32.mrf.mxu0
  %v321 = vadd.f32 %v68, %v320
  %v322 = vpop.f32.mrf.mxu0
  %323 = vmatprep.mubr.bf16.mxu0 0
  %324 = vmatmul.mubr.bf16.gmra.mxu0 %v194
  %v325 = vpop.f32.mrf.mxu0
  %v326 = vadd.f32 %v68, %v325
  %v327 = vpop.f32.mrf.mxu0
  %v328 = vpop.f32.mrf.mxu0
  %v329 = vadd.f32 %v68, %v328
  %v330 = vpop.f32.mrf.mxu0
  %331 = vmatprep.mubr.bf16.mxu0 0
  %332 = vmatmul.mubr.bf16.gmra.mxu0 %v197
  %v333 = vpop.f32.mrf.mxu0
  %v334 = vadd.f32 %v68, %v333
  %v335 = vpop.f32.mrf.mxu0
  %v336 = vpop.f32.mrf.mxu0
  %v337 = vadd.f32 %v68, %v336
  %v338 = vpop.f32.mrf.mxu0
  %339 = vmatprep.mubr.bf16.mxu0 0
  %340 = vmatmul.mubr.bf16.gmra.mxu0 %v200
  %v341 = vpop.f32.mrf.mxu0
  %v342 = vadd.f32 %v68, %v341
  %v343 = vpop.f32.mrf.mxu0
  %v344 = vpop.f32.mrf.mxu0
  %v345 = vadd.f32 %v68, %v344
  %v346 = vpop.f32.mrf.mxu0
  %347 = vmatprep.mubr.bf16.mxu0 0
  %348 = vmatmul.mubr.bf16.gmra.mxu0 %v203
  %v349 = vpop.f32.mrf.mxu0
  %v350 = vadd.f32 %v68, %v349
  %v351 = vpop.f32.mrf.mxu0
  %v352 = vpop.f32.mrf.mxu0
  %v353 = vadd.f32 %v68, %v352
  %v354 = vpop.f32.mrf.mxu0
  %355 = vmatprep.mubr.bf16.mxu0 0
  %356 = vmatmul.mubr.bf16.gmra.mxu0 %v206
  %v357 = vpop.f32.mrf.mxu0
  %v358 = vadd.f32 %v68, %v357
  %v359 = vpop.f32.mrf.mxu0
  %v360 = vpop.f32.mrf.mxu0
  %v361 = vadd.f32 %v68, %v360
  %v362 = vpop.f32.mrf.mxu0
  %363 = vmatprep.mubr.bf16.mxu0 0
  %364 = vmatmul.mubr.bf16.gmra.mxu0 %v209
  %v365 = vpop.f32.mrf.mxu0
  %v366 = vadd.f32 %v68, %v365
  %v367 = vpop.f32.mrf.mxu0
  %v368 = vpop.f32.mrf.mxu0
  %v369 = vadd.f32 %v68, %v368
  %v370 = vpop.f32.mrf.mxu0
  %371 = vdwg.mxu0
  %vm372 = vcmp.gt.f32.partialorder %v246, 0.0
  %vm373 = vcmp.gt.f32.partialorder %v249, 0.0
  %vm374 = vcmp.gt.f32.partialorder %v254, 0.0
  %vm375 = vcmp.gt.f32.partialorder %v257, 0.0
  %vm376 = vcmp.gt.f32.partialorder %v262, 0.0
  %vm377 = vcmp.gt.f32.partialorder %v265, 0.0
  %vm378 = vcmp.gt.f32.partialorder %v270, 0.0
  %vm379 = vcmp.gt.f32.partialorder %v273, 0.0
  %vm380 = vcmp.gt.f32.partialorder %v278, 0.0
  %vm381 = vcmp.gt.f32.partialorder %v281, 0.0
  %vm382 = vcmp.gt.f32.partialorder %v286, 0.0
  %vm383 = vcmp.gt.f32.partialorder %v289, 0.0
  %vm384 = vcmp.gt.f32.partialorder %v294, 0.0
  %vm385 = vcmp.gt.f32.partialorder %v297, 0.0
  %vm386 = vcmp.gt.f32.partialorder %v302, 0.0
  %vm387 = vcmp.gt.f32.partialorder %v305, 0.0
  %vm388 = vcmp.gt.f32.partialorder %v310, 0.0
  %vm389 = vcmp.gt.f32.partialorder %v313, 0.0
  %vm390 = vcmp.gt.f32.partialorder %v318, 0.0
  %vm391 = vcmp.gt.f32.partialorder %v321, 0.0
  %vm392 = vcmp.gt.f32.partialorder %v326, 0.0
  %vm393 = vcmp.gt.f32.partialorder %v329, 0.0
  %vm394 = vcmp.gt.f32.partialorder %v334, 0.0
  %vm395 = vcmp.gt.f32.partialorder %v337, 0.0
  %vm396 = vcmp.gt.f32.partialorder %v342, 0.0
  %vm397 = vcmp.gt.f32.partialorder %v345, 0.0
  %vm398 = vcmp.gt.f32.partialorder %v350, 0.0
  %vm399 = vcmp.gt.f32.partialorder %v353, 0.0
  %vm400 = vcmp.gt.f32.partialorder %v358, 0.0
  %vm401 = vcmp.gt.f32.partialorder %v361, 0.0
  %vm402 = vcmp.gt.f32.partialorder %v366, 0.0
  %vm403 = vcmp.gt.f32.partialorder %v369, 0.0
  %v404 = vmul.f32 %v246, 0.01
  %v405 = vmul.f32 %v249, 0.01
  %v406 = vmul.f32 %v254, 0.01
  %v407 = vmul.f32 %v257, 0.01
  %v408 = vmul.f32 %v262, 0.01
  %v409 = vmul.f32 %v265, 0.01
  %v410 = vmul.f32 %v270, 0.01
  %v411 = vmul.f32 %v273, 0.01
  %v412 = vmul.f32 %v278, 0.01
  %v413 = vmul.f32 %v281, 0.01
  %v414 = vmul.f32 %v286, 0.01
  %v415 = vmul.f32 %v289, 0.01
  %v416 = vmul.f32 %v294, 0.01
  %v417 = vmul.f32 %v297, 0.01
  %v418 = vmul.f32 %v302, 0.01
  %v419 = vmul.f32 %v305, 0.01
  %v420 = vmul.f32 %v310, 0.01
  %v421 = vmul.f32 %v313, 0.01
  %v422 = vmul.f32 %v318, 0.01
  %v423 = vmul.f32 %v321, 0.01
  %v424 = vmul.f32 %v326, 0.01
  %v425 = vmul.f32 %v329, 0.01
  %v426 = vmul.f32 %v334, 0.01
  %v427 = vmul.f32 %v337, 0.01
  %v428 = vmul.f32 %v342, 0.01
  %v429 = vmul.f32 %v345, 0.01
  %v430 = vmul.f32 %v350, 0.01
  %v431 = vmul.f32 %v353, 0.01
  %v432 = vmul.f32 %v358, 0.01
  %v433 = vmul.f32 %v361, 0.01
  %v434 = vmul.f32 %v366, 0.01
  %v435 = vmul.f32 %v369, 0.01
  %v436 = vsel %vm372, %v246, %v404
  %v437 = vsel %vm373, %v249, %v405
  %v438 = vsel %vm374, %v254, %v406
  %v439 = vsel %vm375, %v257, %v407
  %v440 = vsel %vm376, %v262, %v408
  %v441 = vsel %vm377, %v265, %v409
  %v442 = vsel %vm378, %v270, %v410
  %v443 = vsel %vm379, %v273, %v411
  %v444 = vsel %vm380, %v278, %v412
  %v445 = vsel %vm381, %v281, %v413
  %v446 = vsel %vm382, %v286, %v414
  %v447 = vsel %vm383, %v289, %v415
  %v448 = vsel %vm384, %v294, %v416
  %v449 = vsel %vm385, %v297, %v417
  %v450 = vsel %vm386, %v302, %v418
  %v451 = vsel %vm387, %v305, %v419
  %v452 = vsel %vm388, %v310, %v420
  %v453 = vsel %vm389, %v313, %v421
  %v454 = vsel %vm390, %v318, %v422
  %v455 = vsel %vm391, %v321, %v423
  %v456 = vsel %vm392, %v326, %v424
  %v457 = vsel %vm393, %v329, %v425
  %v458 = vsel %vm394, %v334, %v426
  %v459 = vsel %vm395, %v337, %v427
  %v460 = vsel %vm396, %v342, %v428
  %v461 = vsel %vm397, %v345, %v429
  %v462 = vsel %vm398, %v350, %v430
  %v463 = vsel %vm399, %v353, %v431
  %v464 = vsel %vm400, %v358, %v432
  %v465 = vsel %vm401, %v361, %v433
  %v466 = vsel %vm402, %v366, %v434
  %v467 = vsel %vm403, %v369, %v435
  %v468 = vpack.c.bf16 %v437, %v436
  %v469 = vpack.c.bf16 %v439, %v438
  %v470 = vpack.c.bf16 %v441, %v440
  %v471 = vpack.c.bf16 %v443, %v442
  %v472 = vpack.c.bf16 %v445, %v444
  %v473 = vpack.c.bf16 %v447, %v446
  %v474 = vpack.c.bf16 %v449, %v448
  %v475 = vpack.c.bf16 %v451, %v450
  %v476 = vpack.c.bf16 %v453, %v452
  %v477 = vpack.c.bf16 %v455, %v454
  %v478 = vpack.c.bf16 %v457, %v456
  %v479 = vpack.c.bf16 %v459, %v458
  %v480 = vpack.c.bf16 %v461, %v460
  %v481 = vpack.c.bf16 %v463, %v462
  %v482 = vpack.c.bf16 %v465, %v464
  %v483 = vpack.c.bf16 %v467, %v466
  %v484 = vld [vmem:[%s3] sm:$0xf]
  %v485 = vld [vmem:[%s3 + $0x4] sm:$0xf]
  %v486 = vld [vmem:[%s3 + $0x8] sm:$0xf]
  %v487 = vld [vmem:[%s3 + $0xc] sm:$0xf]
  %v488 = vld [vmem:[%s3 + $0x10] sm:$0xf]
  %v489 = vld [vmem:[%s3 + $0x14] sm:$0xf]
  %v490 = vld [vmem:[%s3 + $0x18] sm:$0xf]
  %v491 = vld [vmem:[%s3 + $0x1c] sm:$0xf]
  %v492 = vld [vmem:[%s3 + $0x20] sm:$0xf]
  %v493 = vld [vmem:[%s3 + $0x24] sm:$0xf]
  %v494 = vld [vmem:[%s3 + $0x28] sm:$0xf]
  %v495 = vld [vmem:[%s3 + $0x2c] sm:$0xf]
  %v496 = vld [vmem:[%s3 + $0x30] sm:$0xf]
  %v497 = vld [vmem:[%s3 + $0x34] sm:$0xf]
  %v498 = vld [vmem:[%s3 + $0x38] sm:$0xf]
  %v499 = vld [vmem:[%s3 + $0x3c] sm:$0xf]
  %v500 = vld [vmem:[%s4] sm:$0x1]
  %v502 = vlaneseq
  %v503 = vshrl.u32 %v502, 7
  %v504 = vsub.s32 0, %v503
  %v505 = vrot.slane %v500, %v504
  %v523 = vunpack.c.l.b16 %v484
  %v524 = vunpack.c.l.b16 %v485
  %v525 = vunpack.c.l.b16 %v486
  %v526 = vunpack.c.l.b16 %v487
  %v527 = vunpack.c.l.b16 %v488
  %v528 = vunpack.c.l.b16 %v489
  %v529 = vunpack.c.l.b16 %v490
  %v530 = vunpack.c.l.b16 %v491
  %v531 = vunpack.c.l.b16 %v492
  %v532 = vunpack.c.l.b16 %v493
  %v533 = vunpack.c.l.b16 %v494
  %v534 = vunpack.c.l.b16 %v495
  %v535 = vunpack.c.l.b16 %v496
  %v536 = vunpack.c.l.b16 %v497
  %v537 = vunpack.c.l.b16 %v498
  %v538 = vunpack.c.l.b16 %v499
  %v539 = vpack.c.b16 %v524, %v523
  %v540 = vpack.c.b16 %v526, %v525
  %v541 = vpack.c.b16 %v528, %v527
  %v542 = vpack.c.b16 %v530, %v529
  %v543 = vpack.c.b16 %v532, %v531
  %v544 = vpack.c.b16 %v534, %v533
  %v545 = vpack.c.b16 %v536, %v535
  %v546 = vpack.c.b16 %v538, %v537
  %555 = vmatprep.subr.bf16.mxu0 0
  %556 = vmatpush1.bf16.msra.mxu0 %v546
  %557 = vmatprep.subr.bf16.mxu0 0
  %558 = vmatpush1.bf16.msra.mxu0 %v545
  %559 = vmatprep.subr.bf16.mxu0 0
  %560 = vmatpush1.bf16.msra.mxu0 %v544
  %561 = vmatprep.subr.bf16.mxu0 0
  %562 = vmatpush1.bf16.msra.mxu0 %v543
  %563 = vmatprep.subr.bf16.mxu0 0
  %564 = vmatpush1.bf16.msra.mxu0 %v542
  %565 = vmatprep.subr.bf16.mxu0 0
  %566 = vmatpush1.bf16.msra.mxu0 %v541
  %567 = vmatprep.subr.bf16.mxu0 0
  %568 = vmatpush1.bf16.msra.mxu0 %v540
  %569 = vmatprep.subr.bf16.mxu0 0
  %570 = vmatpush1.bf16.msra.mxu0 %v539
  %571 = vmatprep.subr.bf16.mxu0 0
  %572 = vmatpush2.bf16.msra.mxu0 0
  %573 = vmatprep.subr.bf16.mxu0 0
  %574 = vmatpush2.bf16.msra.mxu0 0
  %575 = vmatprep.subr.bf16.mxu0 0
  %576 = vmatpush2.bf16.msra.mxu0 0
  %577 = vmatprep.subr.bf16.mxu0 0
  %578 = vmatpush2.bf16.msra.mxu0 0
  %579 = vmatprep.subr.bf16.mxu0 0
  %580 = vmatpush2.bf16.msra.mxu0 0
  %581 = vmatprep.subr.bf16.mxu0 0
  %582 = vmatpush2.bf16.msra.mxu0 0
  %583 = vmatprep.subr.bf16.mxu0 0
  %584 = vmatpush2.bf16.msra.mxu0 0
  %585 = vmatprep.subr.bf16.mxu0 0
  %586 = vmatpush2.bf16.msra.mxu0 0
  %587 = vmatprep.mubr.bf16.mxu0 0
  %588 = vmatmul.mubr.bf16.gmra.mxu0 %v468
  %v589 = vpop.f32.mrf.mxu0
  %v590 = vadd.f32 %v505, %v589
  %v591 = vpop.f32.mrf.mxu0
  %v592 = vpop.f32.mrf.mxu0
  %v593 = vadd.f32 %v505, %v592
  %v594 = vpop.f32.mrf.mxu0
  %595 = vmatprep.mubr.bf16.mxu0 0
  %596 = vmatmul.mubr.bf16.gmra.mxu0 %v469
  %v597 = vpop.f32.mrf.mxu0
  %v598 = vadd.f32 %v505, %v597
  %v599 = vpop.f32.mrf.mxu0
  %v600 = vpop.f32.mrf.mxu0
  %v601 = vadd.f32 %v505, %v600
  %v602 = vpop.f32.mrf.mxu0
  %603 = vmatprep.mubr.bf16.mxu0 0
  %604 = vmatmul.mubr.bf16.gmra.mxu0 %v470
  %v605 = vpop.f32.mrf.mxu0
  %v606 = vadd.f32 %v505, %v605
  %v607 = vpop.f32.mrf.mxu0
  %v608 = vpop.f32.mrf.mxu0
  %v609 = vadd.f32 %v505, %v608
  %v610 = vpop.f32.mrf.mxu0
  %611 = vmatprep.mubr.bf16.mxu0 0
  %612 = vmatmul.mubr.bf16.gmra.mxu0 %v471
  %v613 = vpop.f32.mrf.mxu0
  %v614 = vadd.f32 %v505, %v613
  %v615 = vpop.f32.mrf.mxu0
  %v616 = vpop.f32.mrf.mxu0
  %v617 = vadd.f32 %v505, %v616
  %v618 = vpop.f32.mrf.mxu0
  %619 = vmatprep.mubr.bf16.mxu0 0
  %620 = vmatmul.mubr.bf16.gmra.mxu0 %v472
  %v621 = vpop.f32.mrf.mxu0
  %v622 = vadd.f32 %v505, %v621
  %v623 = vpop.f32.mrf.mxu0
  %v624 = vpop.f32.mrf.mxu0
  %v625 = vadd.f32 %v505, %v624
  %v626 = vpop.f32.mrf.mxu0
  %627 = vmatprep.mubr.bf16.mxu0 0
  %628 = vmatmul.mubr.bf16.gmra.mxu0 %v473
  %v629 = vpop.f32.mrf.mxu0
  %v630 = vadd.f32 %v505, %v629
  %v631 = vpop.f32.mrf.mxu0
  %v632 = vpop.f32.mrf.mxu0
  %v633 = vadd.f32 %v505, %v632
  %v634 = vpop.f32.mrf.mxu0
  %635 = vmatprep.mubr.bf16.mxu0 0
  %636 = vmatmul.mubr.bf16.gmra.mxu0 %v474
  %v637 = vpop.f32.mrf.mxu0
  %v638 = vadd.f32 %v505, %v637
  %v639 = vpop.f32.mrf.mxu0
  %v640 = vpop.f32.mrf.mxu0
  %v641 = vadd.f32 %v505, %v640
  %v642 = vpop.f32.mrf.mxu0
  %643 = vmatprep.mubr.bf16.mxu0 0
  %644 = vmatmul.mubr.bf16.gmra.mxu0 %v475
  %v645 = vpop.f32.mrf.mxu0
  %v646 = vadd.f32 %v505, %v645
  %v647 = vpop.f32.mrf.mxu0
  %v648 = vpop.f32.mrf.mxu0
  %v649 = vadd.f32 %v505, %v648
  %v650 = vpop.f32.mrf.mxu0
  %651 = vmatprep.mubr.bf16.mxu0 0
  %652 = vmatmul.mubr.bf16.gmra.mxu0 %v476
  %v653 = vpop.f32.mrf.mxu0
  %v654 = vadd.f32 %v505, %v653
  %v655 = vpop.f32.mrf.mxu0
  %v656 = vpop.f32.mrf.mxu0
  %v657 = vadd.f32 %v505, %v656
  %v658 = vpop.f32.mrf.mxu0
  %659 = vmatprep.mubr.bf16.mxu0 0
  %660 = vmatmul.mubr.bf16.gmra.mxu0 %v477
  %v661 = vpop.f32.mrf.mxu0
  %v662 = vadd.f32 %v505, %v661
  %v663 = vpop.f32.mrf.mxu0
  %v664 = vpop.f32.mrf.mxu0
  %v665 = vadd.f32 %v505, %v664
  %v666 = vpop.f32.mrf.mxu0
  %667 = vmatprep.mubr.bf16.mxu0 0
  %668 = vmatmul.mubr.bf16.gmra.mxu0 %v478
  %v669 = vpop.f32.mrf.mxu0
  %v670 = vadd.f32 %v505, %v669
  %v671 = vpop.f32.mrf.mxu0
  %v672 = vpop.f32.mrf.mxu0
  %v673 = vadd.f32 %v505, %v672
  %v674 = vpop.f32.mrf.mxu0
  %675 = vmatprep.mubr.bf16.mxu0 0
  %676 = vmatmul.mubr.bf16.gmra.mxu0 %v479
  %v677 = vpop.f32.mrf.mxu0
  %v678 = vadd.f32 %v505, %v677
  %v679 = vpop.f32.mrf.mxu0
  %v680 = vpop.f32.mrf.mxu0
  %v681 = vadd.f32 %v505, %v680
  %v682 = vpop.f32.mrf.mxu0
  %683 = vmatprep.mubr.bf16.mxu0 0
  %684 = vmatmul.mubr.bf16.gmra.mxu0 %v480
  %v685 = vpop.f32.mrf.mxu0
  %v686 = vadd.f32 %v505, %v685
  %v687 = vpop.f32.mrf.mxu0
  %v688 = vpop.f32.mrf.mxu0
  %v689 = vadd.f32 %v505, %v688
  %v690 = vpop.f32.mrf.mxu0
  %691 = vmatprep.mubr.bf16.mxu0 0
  %692 = vmatmul.mubr.bf16.gmra.mxu0 %v481
  %v693 = vpop.f32.mrf.mxu0
  %v694 = vadd.f32 %v505, %v693
  %v695 = vpop.f32.mrf.mxu0
  %v696 = vpop.f32.mrf.mxu0
  %v697 = vadd.f32 %v505, %v696
  %v698 = vpop.f32.mrf.mxu0
  %699 = vmatprep.mubr.bf16.mxu0 0
  %700 = vmatmul.mubr.bf16.gmra.mxu0 %v482
  %v701 = vpop.f32.mrf.mxu0
  %v702 = vadd.f32 %v505, %v701
  %v703 = vpop.f32.mrf.mxu0
  %v704 = vpop.f32.mrf.mxu0
  %v705 = vadd.f32 %v505, %v704
  %v706 = vpop.f32.mrf.mxu0
  %707 = vmatprep.mubr.bf16.mxu0 0
  %708 = vmatmul.mubr.bf16.gmra.mxu0 %v483
  %v709 = vpop.f32.mrf.mxu0
  %v710 = vadd.f32 %v505, %v709
  %v711 = vpop.f32.mrf.mxu0
  %v712 = vpop.f32.mrf.mxu0
  %v713 = vadd.f32 %v505, %v712
  %v714 = vpop.f32.mrf.mxu0
  %715 = vdwg.mxu0
  %vm716 = vcmp.gt.f32.partialorder %v590, 0.0
  %vm717 = vcmp.gt.f32.partialorder %v593, 0.0
  %vm718 = vcmp.gt.f32.partialorder %v598, 0.0
  %vm719 = vcmp.gt.f32.partialorder %v601, 0.0
  %vm720 = vcmp.gt.f32.partialorder %v606, 0.0
  %vm721 = vcmp.gt.f32.partialorder %v609, 0.0
  %vm722 = vcmp.gt.f32.partialorder %v614, 0.0
  %vm723 = vcmp.gt.f32.partialorder %v617, 0.0
  %vm724 = vcmp.gt.f32.partialorder %v622, 0.0
  %vm725 = vcmp.gt.f32.partialorder %v625, 0.0
  %vm726 = vcmp.gt.f32.partialorder %v630, 0.0
  %vm727 = vcmp.gt.f32.partialorder %v633, 0.0
  %vm728 = vcmp.gt.f32.partialorder %v638, 0.0
  %vm729 = vcmp.gt.f32.partialorder %v641, 0.0
  %vm730 = vcmp.gt.f32.partialorder %v646, 0.0
  %vm731 = vcmp.gt.f32.partialorder %v649, 0.0
  %vm732 = vcmp.gt.f32.partialorder %v654, 0.0
  %vm733 = vcmp.gt.f32.partialorder %v657, 0.0
  %vm734 = vcmp.gt.f32.partialorder %v662, 0.0
  %vm735 = vcmp.gt.f32.partialorder %v665, 0.0
  %vm736 = vcmp.gt.f32.partialorder %v670, 0.0
  %vm737 = vcmp.gt.f32.partialorder %v673, 0.0
  %vm738 = vcmp.gt.f32.partialorder %v678, 0.0
  %vm739 = vcmp.gt.f32.partialorder %v681, 0.0
  %vm740 = vcmp.gt.f32.partialorder %v686, 0.0
  %vm741 = vcmp.gt.f32.partialorder %v689, 0.0
  %vm742 = vcmp.gt.f32.partialorder %v694, 0.0
  %vm743 = vcmp.gt.f32.partialorder %v697, 0.0
  %vm744 = vcmp.gt.f32.partialorder %v702, 0.0
  %vm745 = vcmp.gt.f32.partialorder %v705, 0.0
  %vm746 = vcmp.gt.f32.partialorder %v710, 0.0
  %vm747 = vcmp.gt.f32.partialorder %v713, 0.0
  %v748 = vmul.f32 %v590, 0.01
  %v749 = vmul.f32 %v593, 0.01
  %v750 = vmul.f32 %v598, 0.01
  %v751 = vmul.f32 %v601, 0.01
  %v752 = vmul.f32 %v606, 0.01
  %v753 = vmul.f32 %v609, 0.01
  %v754 = vmul.f32 %v614, 0.01
  %v755 = vmul.f32 %v617, 0.01
  %v756 = vmul.f32 %v622, 0.01
  %v757 = vmul.f32 %v625, 0.01
  %v758 = vmul.f32 %v630, 0.01
  %v759 = vmul.f32 %v633, 0.01
  %v760 = vmul.f32 %v638, 0.01
  %v761 = vmul.f32 %v641, 0.01
  %v762 = vmul.f32 %v646, 0.01
  %v763 = vmul.f32 %v649, 0.01
  %v764 = vmul.f32 %v654, 0.01
  %v765 = vmul.f32 %v657, 0.01
  %v766 = vmul.f32 %v662, 0.01
  %v767 = vmul.f32 %v665, 0.01
  %v768 = vmul.f32 %v670, 0.01
  %v769 = vmul.f32 %v673, 0.01
  %v770 = vmul.f32 %v678, 0.01
  %v771 = vmul.f32 %v681, 0.01
  %v772 = vmul.f32 %v686, 0.01
  %v773 = vmul.f32 %v689, 0.01
  %v774 = vmul.f32 %v694, 0.01
  %v775 = vmul.f32 %v697, 0.01
  %v776 = vmul.f32 %v702, 0.01
  %v777 = vmul.f32 %v705, 0.01
  %v778 = vmul.f32 %v710, 0.01
  %v779 = vmul.f32 %v713, 0.01
  %v780 = vsel %vm716, %v590, %v748
  %v781 = vsel %vm717, %v593, %v749
  %v782 = vsel %vm718, %v598, %v750
  %v783 = vsel %vm719, %v601, %v751
  %v784 = vsel %vm720, %v606, %v752
  %v785 = vsel %vm721, %v609, %v753
  %v786 = vsel %vm722, %v614, %v754
  %v787 = vsel %vm723, %v617, %v755
  %v788 = vsel %vm724, %v622, %v756
  %v789 = vsel %vm725, %v625, %v757
  %v790 = vsel %vm726, %v630, %v758
  %v791 = vsel %vm727, %v633, %v759
  %v792 = vsel %vm728, %v638, %v760
  %v793 = vsel %vm729, %v641, %v761
  %v794 = vsel %vm730, %v646, %v762
  %v795 = vsel %vm731, %v649, %v763
  %v796 = vsel %vm732, %v654, %v764
  %v797 = vsel %vm733, %v657, %v765
  %v798 = vsel %vm734, %v662, %v766
  %v799 = vsel %vm735, %v665, %v767
  %v800 = vsel %vm736, %v670, %v768
  %v801 = vsel %vm737, %v673, %v769
  %v802 = vsel %vm738, %v678, %v770
  %v803 = vsel %vm739, %v681, %v771
  %v804 = vsel %vm740, %v686, %v772
  %v805 = vsel %vm741, %v689, %v773
  %v806 = vsel %vm742, %v694, %v774
  %v807 = vsel %vm743, %v697, %v775
  %v808 = vsel %vm744, %v702, %v776
  %v809 = vsel %vm745, %v705, %v777
  %v810 = vsel %vm746, %v710, %v778
  %v811 = vsel %vm747, %v713, %v779
  %v812 = vpack.c.bf16 %v781, %v780
  %v813 = vpack.c.bf16 %v783, %v782
  %v814 = vpack.c.bf16 %v785, %v784
  %v815 = vpack.c.bf16 %v787, %v786
  %v816 = vpack.c.bf16 %v789, %v788
  %v817 = vpack.c.bf16 %v791, %v790
  %v818 = vpack.c.bf16 %v793, %v792
  %v819 = vpack.c.bf16 %v795, %v794
  %v820 = vpack.c.bf16 %v797, %v796
  %v821 = vpack.c.bf16 %v799, %v798
  %v822 = vpack.c.bf16 %v801, %v800
  %v823 = vpack.c.bf16 %v803, %v802
  %v824 = vpack.c.bf16 %v805, %v804
  %v825 = vpack.c.bf16 %v807, %v806
  %v826 = vpack.c.bf16 %v809, %v808
  %v827 = vpack.c.bf16 %v811, %v810
  %v828 = vld [vmem:[%s5] sm:$0xf]
  %v829 = vld [vmem:[%s5 + $0x4] sm:$0xf]
  %v830 = vld [vmem:[%s5 + $0x8] sm:$0xf]
  %v831 = vld [vmem:[%s5 + $0xc] sm:$0xf]
  %v832 = vld [vmem:[%s5 + $0x10] sm:$0xf]
  %v833 = vld [vmem:[%s5 + $0x14] sm:$0xf]
  %v834 = vld [vmem:[%s5 + $0x18] sm:$0xf]
  %v835 = vld [vmem:[%s5 + $0x1c] sm:$0xf]
  %v836 = vld [vmem:[%s5 + $0x20] sm:$0xf]
  %v837 = vld [vmem:[%s5 + $0x24] sm:$0xf]
  %v838 = vld [vmem:[%s5 + $0x28] sm:$0xf]
  %v839 = vld [vmem:[%s5 + $0x2c] sm:$0xf]
  %v840 = vld [vmem:[%s5 + $0x30] sm:$0xf]
  %v841 = vld [vmem:[%s5 + $0x34] sm:$0xf]
  %v842 = vld [vmem:[%s5 + $0x38] sm:$0xf]
  %v843 = vld [vmem:[%s5 + $0x3c] sm:$0xf]
  %v844 = vld [vmem:[%s6] sm:$0x1]
  %v846 = vlaneseq
  %v847 = vshrl.u32 %v846, 7
  %v848 = vsub.s32 0, %v847
  %v849 = vrot.slane %v844, %v848
  %v867 = vunpack.c.l.b16 %v828
  %v868 = vunpack.c.l.b16 %v829
  %v869 = vunpack.c.l.b16 %v830
  %v870 = vunpack.c.l.b16 %v831
  %v871 = vunpack.c.l.b16 %v832
  %v872 = vunpack.c.l.b16 %v833
  %v873 = vunpack.c.l.b16 %v834
  %v874 = vunpack.c.l.b16 %v835
  %v875 = vunpack.c.l.b16 %v836
  %v876 = vunpack.c.l.b16 %v837
  %v877 = vunpack.c.l.b16 %v838
  %v878 = vunpack.c.l.b16 %v839
  %v879 = vunpack.c.l.b16 %v840
  %v880 = vunpack.c.l.b16 %v841
  %v881 = vunpack.c.l.b16 %v842
  %v882 = vunpack.c.l.b16 %v843
  %v883 = vpack.c.b16 %v868, %v867
  %v884 = vpack.c.b16 %v870, %v869
  %v885 = vpack.c.b16 %v872, %v871
  %v886 = vpack.c.b16 %v874, %v873
  %v887 = vpack.c.b16 %v876, %v875
  %v888 = vpack.c.b16 %v878, %v877
  %v889 = vpack.c.b16 %v880, %v879
  %v890 = vpack.c.b16 %v882, %v881
  %899 = vmatprep.subr.bf16.mxu0 0
  %900 = vmatpush1.bf16.msra.mxu0 %v890
  %901 = vmatprep.subr.bf16.mxu0 0
  %902 = vmatpush1.bf16.msra.mxu0 %v889
  %903 = vmatprep.subr.bf16.mxu0 0
  %904 = vmatpush1.bf16.msra.mxu0 %v888
  %905 = vmatprep.subr.bf16.mxu0 0
  %906 = vmatpush1.bf16.msra.mxu0 %v887
  %907 = vmatprep.subr.bf16.mxu0 0
  %908 = vmatpush1.bf16.msra.mxu0 %v886
  %909 = vmatprep.subr.bf16.mxu0 0
  %910 = vmatpush1.bf16.msra.mxu0 %v885
  %911 = vmatprep.subr.bf16.mxu0 0
  %912 = vmatpush1.bf16.msra.mxu0 %v884
  %913 = vmatprep.subr.bf16.mxu0 0
  %914 = vmatpush1.bf16.msra.mxu0 %v883
  %915 = vmatprep.subr.bf16.mxu0 0
  %916 = vmatpush2.bf16.msra.mxu0 0
  %917 = vmatprep.subr.bf16.mxu0 0
  %918 = vmatpush2.bf16.msra.mxu0 0
  %919 = vmatprep.subr.bf16.mxu0 0
  %920 = vmatpush2.bf16.msra.mxu0 0
  %921 = vmatprep.subr.bf16.mxu0 0
  %922 = vmatpush2.bf16.msra.mxu0 0
  %923 = vmatprep.subr.bf16.mxu0 0
  %924 = vmatpush2.bf16.msra.mxu0 0
  %925 = vmatprep.subr.bf16.mxu0 0
  %926 = vmatpush2.bf16.msra.mxu0 0
  %927 = vmatprep.subr.bf16.mxu0 0
  %928 = vmatpush2.bf16.msra.mxu0 0
  %929 = vmatprep.subr.bf16.mxu0 0
  %930 = vmatpush2.bf16.msra.mxu0 0
  %931 = vmatprep.mubr.bf16.mxu0 0
  %932 = vmatmul.mubr.bf16.gmra.mxu0 %v812
  %v933 = vpop.f32.mrf.mxu0
  %v934 = vadd.f32 %v849, %v933
  %v935 = vpop.f32.mrf.mxu0
  %v936 = vpop.f32.mrf.mxu0
  %v937 = vadd.f32 %v849, %v936
  %v938 = vpop.f32.mrf.mxu0
  %939 = vmatprep.mubr.bf16.mxu0 0
  %940 = vmatmul.mubr.bf16.gmra.mxu0 %v813
  %v941 = vpop.f32.mrf.mxu0
  %v942 = vadd.f32 %v849, %v941
  %v943 = vpop.f32.mrf.mxu0
  %v944 = vpop.f32.mrf.mxu0
  %v945 = vadd.f32 %v849, %v944
  %v946 = vpop.f32.mrf.mxu0
  %947 = vmatprep.mubr.bf16.mxu0 0
  %948 = vmatmul.mubr.bf16.gmra.mxu0 %v814
  %v949 = vpop.f32.mrf.mxu0
  %v950 = vadd.f32 %v849, %v949
  %v951 = vpop.f32.mrf.mxu0
  %v952 = vpop.f32.mrf.mxu0
  %v953 = vadd.f32 %v849, %v952
  %v954 = vpop.f32.mrf.mxu0
  %955 = vmatprep.mubr.bf16.mxu0 0
  %956 = vmatmul.mubr.bf16.gmra.mxu0 %v815
  %v957 = vpop.f32.mrf.mxu0
  %v958 = vadd.f32 %v849, %v957
  %v959 = vpop.f32.mrf.mxu0
  %v960 = vpop.f32.mrf.mxu0
  %v961 = vadd.f32 %v849, %v960
  %v962 = vpop.f32.mrf.mxu0
  %963 = vmatprep.mubr.bf16.mxu0 0
  %964 = vmatmul.mubr.bf16.gmra.mxu0 %v816
  %v965 = vpop.f32.mrf.mxu0
  %v966 = vadd.f32 %v849, %v965
  %v967 = vpop.f32.mrf.mxu0
  %v968 = vpop.f32.mrf.mxu0
  %v969 = vadd.f32 %v849, %v968
  %v970 = vpop.f32.mrf.mxu0
  %971 = vmatprep.mubr.bf16.mxu0 0
  %972 = vmatmul.mubr.bf16.gmra.mxu0 %v817
  %v973 = vpop.f32.mrf.mxu0
  %v974 = vadd.f32 %v849, %v973
  %v975 = vpop.f32.mrf.mxu0
  %v976 = vpop.f32.mrf.mxu0
  %v977 = vadd.f32 %v849, %v976
  %v978 = vpop.f32.mrf.mxu0
  %979 = vmatprep.mubr.bf16.mxu0 0
  %980 = vmatmul.mubr.bf16.gmra.mxu0 %v818
  %v981 = vpop.f32.mrf.mxu0
  %v982 = vadd.f32 %v849, %v981
  %v983 = vpop.f32.mrf.mxu0
  %v984 = vpop.f32.mrf.mxu0
  %v985 = vadd.f32 %v849, %v984
  %v986 = vpop.f32.mrf.mxu0
  %987 = vmatprep.mubr.bf16.mxu0 0
  %988 = vmatmul.mubr.bf16.gmra.mxu0 %v819
  %v989 = vpop.f32.mrf.mxu0
  %v990 = vadd.f32 %v849, %v989
  %v991 = vpop.f32.mrf.mxu0
  %v992 = vpop.f32.mrf.mxu0
  %v993 = vadd.f32 %v849, %v992
  %v994 = vpop.f32.mrf.mxu0
  %995 = vmatprep.mubr.bf16.mxu0 0
  %996 = vmatmul.mubr.bf16.gmra.mxu0 %v820
  %v997 = vpop.f32.mrf.mxu0
  %v998 = vadd.f32 %v849, %v997
  %v999 = vpop.f32.mrf.mxu0
  %v1000 = vpop.f32.mrf.mxu0
  %v1001 = vadd.f32 %v849, %v1000
  %v1002 = vpop.f32.mrf.mxu0
  %1003 = vmatprep.mubr.bf16.mxu0 0
  %1004 = vmatmul.mubr.bf16.gmra.mxu0 %v821
  %v1005 = vpop.f32.mrf.mxu0
  %v1006 = vadd.f32 %v849, %v1005
  %v1007 = vpop.f32.mrf.mxu0
  %v1008 = vpop.f32.mrf.mxu0
  %v1009 = vadd.f32 %v849, %v1008
  %v1010 = vpop.f32.mrf.mxu0
  %1011 = vmatprep.mubr.bf16.mxu0 0
  %1012 = vmatmul.mubr.bf16.gmra.mxu0 %v822
  %v1013 = vpop.f32.mrf.mxu0
  %v1014 = vadd.f32 %v849, %v1013
  %v1015 = vpop.f32.mrf.mxu0
  %v1016 = vpop.f32.mrf.mxu0
  %v1017 = vadd.f32 %v849, %v1016
  %v1018 = vpop.f32.mrf.mxu0
  %1019 = vmatprep.mubr.bf16.mxu0 0
  %1020 = vmatmul.mubr.bf16.gmra.mxu0 %v823
  %v1021 = vpop.f32.mrf.mxu0
  %v1022 = vadd.f32 %v849, %v1021
  %v1023 = vpop.f32.mrf.mxu0
  %v1024 = vpop.f32.mrf.mxu0
  %v1025 = vadd.f32 %v849, %v1024
  %v1026 = vpop.f32.mrf.mxu0
  %1027 = vmatprep.mubr.bf16.mxu0 0
  %1028 = vmatmul.mubr.bf16.gmra.mxu0 %v824
  %v1029 = vpop.f32.mrf.mxu0
  %v1030 = vadd.f32 %v849, %v1029
  %v1031 = vpop.f32.mrf.mxu0
  %v1032 = vpop.f32.mrf.mxu0
  %v1033 = vadd.f32 %v849, %v1032
  %v1034 = vpop.f32.mrf.mxu0
  %1035 = vmatprep.mubr.bf16.mxu0 0
  %1036 = vmatmul.mubr.bf16.gmra.mxu0 %v825
  %v1037 = vpop.f32.mrf.mxu0
  %v1038 = vadd.f32 %v849, %v1037
  %v1039 = vpop.f32.mrf.mxu0
  %v1040 = vpop.f32.mrf.mxu0
  %v1041 = vadd.f32 %v849, %v1040
  %v1042 = vpop.f32.mrf.mxu0
  %1043 = vmatprep.mubr.bf16.mxu0 0
  %1044 = vmatmul.mubr.bf16.gmra.mxu0 %v826
  %v1045 = vpop.f32.mrf.mxu0
  %v1046 = vadd.f32 %v849, %v1045
  %v1047 = vpop.f32.mrf.mxu0
  %v1048 = vpop.f32.mrf.mxu0
  %v1049 = vadd.f32 %v849, %v1048
  %v1050 = vpop.f32.mrf.mxu0
  %1051 = vmatprep.mubr.bf16.mxu0 0
  %1052 = vmatmul.mubr.bf16.gmra.mxu0 %v827
  %v1053 = vpop.f32.mrf.mxu0
  %v1054 = vadd.f32 %v849, %v1053
  %v1055 = vpop.f32.mrf.mxu0
  %v1056 = vpop.f32.mrf.mxu0
  %v1057 = vadd.f32 %v849, %v1056
  %v1058 = vpop.f32.mrf.mxu0
  %1059 = vdwg.mxu0
  %1060 = vst [vmem:[%s7] sm:$0xff] %v934
  %1061 = vst [vmem:[%s7 + $0x8] sm:$0xff] %v937
  %1062 = vst [vmem:[%s7 + $0x10] sm:$0xff] %v942
  %1063 = vst [vmem:[%s7 + $0x18] sm:$0xff] %v945
  %1064 = vst [vmem:[%s7 + $0x20] sm:$0xff] %v950
  %1065 = vst [vmem:[%s7 + $0x28] sm:$0xff] %v953
  %1066 = vst [vmem:[%s7 + $0x30] sm:$0xff] %v958
  %1067 = vst [vmem:[%s7 + $0x38] sm:$0xff] %v961
  %1068 = vst [vmem:[%s7 + $0x40] sm:$0xff] %v966
  %1069 = vst [vmem:[%s7 + $0x48] sm:$0xff] %v969
  %1070 = vst [vmem:[%s7 + $0x50] sm:$0xff] %v974
  %1071 = vst [vmem:[%s7 + $0x58] sm:$0xff] %v977
  %1072 = vst [vmem:[%s7 + $0x60] sm:$0xff] %v982
  %1073 = vst [vmem:[%s7 + $0x68] sm:$0xff] %v985
  %1074 = vst [vmem:[%s7 + $0x70] sm:$0xff] %v990
  %1075 = vst [vmem:[%s7 + $0x78] sm:$0xff] %v993
  %1076 = vst [vmem:[%s7 + $0x80] sm:$0xff] %v998
  %1077 = vst [vmem:[%s7 + $0x88] sm:$0xff] %v1001
  %1078 = vst [vmem:[%s7 + $0x90] sm:$0xff] %v1006
  %1079 = vst [vmem:[%s7 + $0x98] sm:$0xff] %v1009
  %1080 = vst [vmem:[%s7 + $0xa0] sm:$0xff] %v1014
  %1081 = vst [vmem:[%s7 + $0xa8] sm:$0xff] %v1017
  %1082 = vst [vmem:[%s7 + $0xb0] sm:$0xff] %v1022
  %1083 = vst [vmem:[%s7 + $0xb8] sm:$0xff] %v1025
  %1084 = vst [vmem:[%s7 + $0xc0] sm:$0xff] %v1030
  %1085 = vst [vmem:[%s7 + $0xc8] sm:$0xff] %v1033
  %1086 = vst [vmem:[%s7 + $0xd0] sm:$0xff] %v1038
  %1087 = vst [vmem:[%s7 + $0xd8] sm:$0xff] %v1041
  %1088 = vst [vmem:[%s7 + $0xe0] sm:$0xff] %v1046
  %1089 = vst [vmem:[%s7 + $0xe8] sm:$0xff] %v1049
  %1090 = vst [vmem:[%s7 + $0xf0] sm:$0xff] %v1054
  %1091 = vst [vmem:[%s7 + $0xf8] sm:$0xff] %v1057
  // Predicated region
  $region30: #{model_forward.1} parent=0 // pred_check
    _
  $region31: #{model_forward.1} parent=0 // pred_check_branch
    %1093 = sbr.rel (0) target = $region33
  $region32: #{model_forward.1} parent=0 // pred_region
    _
  $region33: #{model_forward.1} parent=0 // pred_fallthru
    _
  // Predicated region
  $region34: #{model_forward.1} parent=0 // pred_check
    _
  $region35: #{model_forward.1} parent=0 // pred_check_branch
    %1095 = sbr.rel (0) target = $region37
  $region36: #{model_forward.1} parent=0 // pred_region
    _
  $region37: #{model_forward.1} parent=0 // pred_fallthru
    _

</llo_original>
